<compile_context>
chip_gen: v7x
topology: tpu7x:2x2x1
jax: 0.10.0
libtpu: 0.0.40
codegen_flags: <defaults>
</compile_context>

<pallas_src>
import jax
import jax.numpy as jnp
from jax import lax
from jax.experimental import pallas as pl
from jax.experimental.pallas import tpu as pltpu

C_MID = 7                    # hidden channel count fixed by the module
N_TAPS = 9                   # 3x3 kernel taps
K1 = N_TAPS * C_MID          # 63 im2col columns for the 3x3 conv
LANES = 128
TAP_PAD = 16                 # patch columns: 9 taps + ones + centre-dup + 5 zero pad
CENTER_TAP = 4               # tap (dy=1,dx=1) == x[2i,2j] (the down-branch input)
ONES_COL = 9                 # constant-1 column (folds biases into the matmuls)
CENTER2_COL = 10             # duplicate centre column (carries the low half of dw)
VMEM_LIMIT_BYTES = 48 * 1024 * 1024  # > v5e 16 MiB scoped default, < v7x 64 MiB physical


# ----------------------------------------------------------------------------- kernel
def basic_block_kernel(patches_ref, wexp_ref, w2_ref, bias2_ref, w3_ref, dwexp_ref,
                       out_ref):
    patches = patches_ref[...]                     # [TB, 16]   (compute dtype)
    wexp = wexp_ref[...]                           # [16, 128]  conv1 expansion + BN1 bias row
    w2 = w2_ref[...]                               # [128, 128] conv2 im2col weights
    w3 = w3_ref[...]                               # [128, 128] conv3 weights
    dwexp = dwexp_ref[...]                         # [16, 128]  down branch + BN3/BNd biases

    # conv1 (1x1, 1->7) on every tap + BN1 bias (via the ones column), MXU, f32 acc.
    h1 = jnp.dot(patches, wexp, preferred_element_type=jnp.float32)        # [TB, 128]
    h1 = jnp.maximum(h1, 0.0)                      # ReLU1 (halo taps fixed by bias2 below)
    # conv2 (3x3, stride 2, pad 1) as an im2col matmul + per-pixel (BN2 bias - halo
    # correction), then ReLU2.
    h2 = jnp.dot(h1.astype(w2.dtype), w2, preferred_element_type=jnp.float32)
    h2 = jnp.maximum(h2 + bias2_ref[...], 0.0)
    # conv3 (1x1, 7->out). Down branch (centre tap * dw, hi+lo split) plus the BN3 and
    # BN-down biases all come from one extra matmul on the already-loaded patches.
    h3 = jnp.dot(h2.astype(w3.dtype), w3, preferred_element_type=jnp.float32)
    down = jnp.dot(patches, dwexp, preferred_element_type=jnp.float32)
    # Residual add + final ReLU, lane-dense store.
    out_ref[...] = jnp.maximum(h3 + down, 0.0).astype(out_ref.dtype)


# ------------------------------------------------------------------- parameter packing
def init_raw_params(key, out_channels):
    """Deterministic parameters mirroring the PyTorch module (convs + BN stats)."""
    ks = jax.random.split(key, 8)

    def bn_params(k, c):
        k1, k2, k3, k4 = jax.random.split(k, 4)
        return {
            "gamma": jax.random.uniform(k1, (c,), jnp.float32, 0.5, 1.5),
            "beta": 0.1 * jax.random.normal(k2, (c,), jnp.float32),
            "mean": 0.1 * jax.random.normal(k3, (c,), jnp.float32),
            "var": jax.random.uniform(k4, (c,), jnp.float32, 0.5, 1.5),
        }

    return {
        "w1": 0.5 * jax.random.normal(ks[0], (C_MID, 1, 1, 1), jnp.float32),
        "bn1": bn_params(ks[4], C_MID),
        "w2": jax.random.normal(ks[1], (C_MID, C_MID, 3, 3), jnp.float32) / jnp.sqrt(9.0 * C_MID),
        "bn2": bn_params(ks[5], C_MID),
        "w3": jax.random.normal(ks[2], (out_channels, C_MID, 1, 1), jnp.float32) / jnp.sqrt(1.0 * C_MID),
        "bn3": bn_params(ks[6], out_channels),
        "wd": jax.random.normal(ks[3], (1, 1, 1, 1), jnp.float32),
        "bnd": bn_params(ks[7], 1),
    }


def fold_and_pack_params(raw, out_channels, compute_dtype=jnp.bfloat16, eps=1e-5):
    """Fold BN (inference mode) into the convs and pack into lane-padded kernel operands."""
    assert out_channels <= LANES

    def fold(w, bn):  # w: [Co, Ci, kh, kw]
        s = bn["gamma"] / jnp.sqrt(bn["var"] + eps)
        return w * s[:, None, None, None], bn["beta"] - bn["mean"] * s

    w1f, b1f = fold(raw["w1"], raw["bn1"])      # [7,1,1,1], [7]
    w2f, b2f = fold(raw["w2"], raw["bn2"])      # [7,7,3,3], [7]
    w3f, b3f = fold(raw["w3"], raw["bn3"])      # [out,7,1,1], [out]
    wdf, bdf = fold(raw["wd"], raw["bnd"])      # [1,1,1,1], [1]

    # conv1 as a (patch-col -> tap*channel) block-diagonal expansion: [9, 63];
    # row ONES_COL carries the BN1 bias so no separate in-kernel bias add is needed.
    we1 = w1f[:, 0, 0, 0]                                              # [7]
    wexp = jnp.kron(jnp.eye(N_TAPS, dtype=jnp.float32), we1[None, :])  # [9, 63]
    wexp = jnp.pad(wexp, ((0, TAP_PAD - N_TAPS), (0, LANES - K1)))
    be1_row = jnp.pad(jnp.tile(b1f, N_TAPS), (0, LANES - K1))
    wexp = wexp.at[ONES_COL].set(be1_row)

    # conv2 im2col matrix: row k = (dy*3+dx)*7 + ci -> col co, padded to [128,128].
    w2m = jnp.transpose(w2f, (2, 3, 1, 0)).reshape(K1, C_MID)
    w2m = jnp.pad(w2m, ((0, LANES - K1), (0, LANES - C_MID)))
    be2 = jnp.pad(b2f, (0, LANES - C_MID))                              # [128] f32

    # conv3: [7, out] padded to [128, 128].
    w3m = jnp.transpose(w3f[:, :, 0, 0], (1, 0))
    w3m = jnp.pad(w3m, ((0, LANES - C_MID), (0, LANES - out_channels)))

    # Down branch + BN3/BNd biases as one matmul on the patches:
    #   row CENTER_TAP  = high half of dw (replicated over lanes)
    #   row CENTER2_COL = low half of dw  (bf16 path keeps full dw precision)
    #   row ONES_COL    = BN3 bias + BNd bias
    dwf = wdf[0, 0, 0, 0]
    dw_hi = dwf.astype(compute_dtype).astype(jnp.float32)
    dw_lo = dwf - dw_hi
    dwexp = jnp.zeros((TAP_PAD, LANES), jnp.float32)
    dwexp = dwexp.at[CENTER_TAP, :].set(dw_hi)
    dwexp = dwexp.at[CENTER2_COL, :].set(dw_lo)
    dwexp = dwexp.at[ONES_COL, :].set(jnp.pad(b3f, (0, LANES - out_channels)) + bdf[0])

    # Per-tap halo correction table: without a mask, a conv2 tap that falls in the
    # zero-padding halo contributes ReLU(b1)*w2 instead of 0. Computed with the same
    # compute-dtype-rounded operands the MXU sees so it cancels (near-)exactly.
    relu_b1 = jnp.maximum(b1f, 0.0).astype(compute_dtype).astype(jnp.float32)   # [7]
    w2r = w2m[:K1].astype(compute_dtype).astype(jnp.float32).reshape(N_TAPS, C_MID, LANES)
    corr_tap = (relu_b1[None, :, None] * w2r).sum(axis=1)               # [9, 128] f32

    return {
        "wexp": wexp.astype(compute_dtype),
        "w2": w2m.astype(compute_dtype),
        "w3": w3m.astype(compute_dtype),
        "dwexp": dwexp.astype(compute_dtype),
        "be2": be2,                     # f32 [128]
        "corr_tap": corr_tap,           # f32 [9, 128]
        "out_channels": int(out_channels),
    }


# ------------------------------------------------------------------------------ wrapper
def basic_block_forward(x, packed, *, rows_per_block=2048, out_dtype=jnp.float32):
    """x: [N, 1, H, W] float32 (NCHW). Returns [N, out, ceil(H/2), ceil(W/2)] out_dtype."""
    N, Cin, H, W = x.shape
    assert Cin == 1, "BasicBlock's down branch is Conv2d(1,1,...): input must have 1 channel"
    out_channels = packed["out_channels"]
    compute_dtype = packed["wexp"].dtype

    Ho = (H - 1) // 2 + 1
    Wo = (W - 1) // 2 + 1
    P = Ho * Wo
    Pp = ((P + 7) // 8) * 8                      # sublane-aligned rows per image

    # ---- im2col patch extraction (layout only; all FLOPs live in the kernel) ----
    def extract_taps(img):                       # [..., H, W] -> [..., Ho, Wo, 9]
        pad_cfg = [(0, 0)] * (img.ndim - 2) + [(1, 1), (1, 1)]
        ip = jnp.pad(img, pad_cfg)
        taps = [ip[..., dy:dy + 2 * Ho:2, dx:dx + 2 * Wo:2]
                for dy in range(3) for dx in range(3)]
        return jnp.stack(taps, axis=-1)

    taps = extract_taps(x[:, 0]).reshape(N, P, N_TAPS)                   # [N, P, 9]
    taps = jnp.pad(taps, ((0, 0), (0, Pp - P), (0, 0)))                  # [N, Pp, 9]
    ones = jnp.ones((N, Pp, 1), jnp.float32)                             # bias carrier
    ctr = taps[:, :, CENTER_TAP:CENTER_TAP + 1]                          # dw-lo carrier
    zpad = jnp.zeros((N, Pp, TAP_PAD - N_TAPS - 2), jnp.float32)
    patches = jnp.concatenate([taps, ones, ctr, zpad], axis=-1)          # [N, Pp, 16]
    patches = patches.astype(compute_dtype)

    # Per-pixel stage-2 bias: BN2 bias minus the halo-tap correction (replaces the mask).
    valid = extract_taps(jnp.ones((H, W), jnp.float32)).reshape(P, N_TAPS)
    halo = 1.0 - valid                                                   # [P, 9]
    bias2 = packed["be2"][None, :] - (halo[:, :, None] * packed["corr_tap"][None]).sum(1)
    bias2 = jnp.pad(bias2, ((0, Pp - P), (0, 0)))                        # [Pp, 128] f32

    # ---- batch blocking: big row tiles, minimal image padding, >=2 grid steps ----
    imb = max(1, min(N, rows_per_block // Pp))
    nblk = -(-N // imb)
    if nblk == 1 and N > 1:
        nblk = 2                                  # let "parallel" shard over v7x's 2 TCs
    imb = -(-N // nblk)                           # rebalance -> minimal padded images
    n_padded = nblk * imb
    if n_padded != N:
        patches = jnp.pad(patches, ((0, n_padded - N), (0, 0), (0, 0)))
    tb = imb * Pp
    patches2d = patches.reshape(nblk * tb, TAP_PAD)                      # [R, 16]
    bias2_tb = jnp.tile(bias2, (imb, 1))                                 # [tb, 128], resident

    inv = lambda i: (0, 0)                                               # grid-invariant operands
    out2d = pl.pallas_call(
        basic_block_kernel,
        out_shape=jax.ShapeDtypeStruct((nblk * tb, LANES), out_dtype),
        grid=(nblk,),
        in_specs=[
            pl.BlockSpec((tb, TAP_PAD), lambda i: (i, 0)),               # patches (streamed)
            pl.BlockSpec((TAP_PAD, LANES), inv),                         # wexp (+ BN1 bias)
            pl.BlockSpec((LANES, LANES), inv),                           # w2
            pl.BlockSpec((tb, LANES), inv),                              # per-pixel bias2
            pl.BlockSpec((LANES, LANES), inv),                           # w3
            pl.BlockSpec((TAP_PAD, LANES), inv),                         # dwexp (+ BN3/BNd bias)
        ],
        out_specs=pl.BlockSpec((tb, LANES), lambda i: (i, 0)),           # lane-dense output
        compiler_params=pltpu.CompilerParams(
            dimension_semantics=("parallel",),
            vmem_limit_bytes=VMEM_LIMIT_BYTES),
    )(patches2d, packed["wexp"], packed["w2"], bias2_tb,
      packed["w3"], packed["dwexp"])

    out = out2d.reshape(n_padded, Pp, LANES)[:N, :P, :out_channels]
    out = out.reshape(N, Ho, Wo, out_channels).transpose(0, 3, 1, 2)     # NCHW (module semantics)
    return out


# ---------------------------------------------------------------------------- reference
def reference_forward(x, raw, eps=1e-5):
    dn = ("NCHW", "OIHW", "NCHW")
    hp = lax.Precision.HIGHEST

    def bn(y, p):
        s = p["gamma"] / jnp.sqrt(p["var"] + eps)
        return y * s[None, :, None, None] + (p["beta"] - p["mean"] * s)[None, :, None, None]

    h = lax.conv_general_dilated(x, raw["w1"], (1, 1), "VALID", dimension_numbers=dn, precision=hp)
    h = jnp.maximum(bn(h, raw["bn1"]), 0.0)
    h = lax.conv_general_dilated(h, raw["w2"], (2, 2), ((1, 1), (1, 1)), dimension_numbers=dn, precision=hp)
    h = jnp.maximum(bn(h, raw["bn2"]), 0.0)
    h = lax.conv_general_dilated(h, raw["w3"], (1, 1), "VALID", dimension_numbers=dn, precision=hp)
    h = bn(h, raw["bn3"])
    d = lax.conv_general_dilated(x, raw["wd"], (2, 2), "VALID", dimension_numbers=dn, precision=hp)
    d = bn(d, raw["bnd"])
    return jnp.maximum(h + d, 0.0)               # down branch broadcasts over channels


# --------------------------------------------------------------------------------- main
if __name__ == "__main__":
    OUT_CHANNELS = 50                            # matches `out = 50` in the lesson file
    batch, H, W = 2, 16, 16                      # module requires 1 input channel

    key = jax.random.PRNGKey(0)
    kx, kp = jax.random.split(key)
    x = jax.random.normal(kx, (batch, 1, H, W), dtype=jnp.float32)
    raw = init_raw_params(kp, OUT_CHANNELS)

    y_ref = reference_forward(x, raw)

    # f32-operand path. Tolerance is dominated by the MXU's f32-matmul decomposition at
    # default precision (not by packing): any layout/packing bug shows up as O(1) error.
    packed_f32 = fold_and_pack_params(raw, OUT_CHANNELS, compute_dtype=jnp.float32)
    y_f32 = jax.block_until_ready(basic_block_forward(x, packed_f32))
    assert y_f32.shape == y_ref.shape == (batch, OUT_CHANNELS, H // 2, W // 2)
    assert bool(jnp.allclose(y_f32, y_ref, atol=2e-2, rtol=2e-2))

    # Default bf16-fed MXU path (bf16 operands, f32 accumulation / bias / ReLU).
    packed_bf16 = fold_and_pack_params(raw, OUT_CHANNELS)    # compute_dtype=bf16 default
    y_bf16 = jax.block_until_ready(basic_block_forward(x, packed_bf16))
    assert bool(jnp.allclose(y_bf16, y_ref, atol=5e-2, rtol=5e-2))

    print("KERNEL_OK")
</pallas_src>

<mosaic_0001>
module attributes {stable_mosaic.version = 11 : i64} {
  func.func @basic_block_kernel(%arg0: i32, %arg1: memref<64x16xf32, #tpu.memory_space<vmem>>, %arg2: memref<16x128xf32, #tpu.memory_space<vmem>>, %arg3: memref<128x128xf32, #tpu.memory_space<vmem>>, %arg4: memref<64x128xf32, #tpu.memory_space<vmem>>, %arg5: memref<128x128xf32, #tpu.memory_space<vmem>>, %arg6: memref<16x128xf32, #tpu.memory_space<vmem>>, %arg7: memref<64x128xf32, #tpu.memory_space<vmem>>) attributes {dimension_semantics = [#tpu.dimension_semantics<parallel>], iteration_bounds = array<i64: 2>, scalar_prefetch = 0 : i64, scratch_operands = 0 : i64, tpu.core_type = #tpu.core_type<tc>, window_params = [{transform_indices = @transform_0, window_bounds = array<i64: 64, 16>}, {pipeline_mode = #tpu.pipeline_mode<synchronous>, transform_indices = @transform_1, window_bounds = array<i64: 16, 128>}, {pipeline_mode = #tpu.pipeline_mode<synchronous>, transform_indices = @transform_2, window_bounds = array<i64: 128, 128>}, {pipeline_mode = #tpu.pipeline_mode<synchronous>, transform_indices = @transform_3, window_bounds = array<i64: 64, 128>}, {pipeline_mode = #tpu.pipeline_mode<synchronous>, transform_indices = @transform_4, window_bounds = array<i64: 128, 128>}, {pipeline_mode = #tpu.pipeline_mode<synchronous>, transform_indices = @transform_5, window_bounds = array<i64: 16, 128>}, {transform_indices = @transform_6, window_bounds = array<i64: 64, 128>}]} {
    %c0 = arith.constant 0 : index
    %c0_0 = arith.constant 0 : index
    %0 = vector.load %arg1[%c0, %c0_0] : memref<64x16xf32, #tpu.memory_space<vmem>>, vector<64x16xf32>
    %c0_1 = arith.constant 0 : index
    %c0_2 = arith.constant 0 : index
    %1 = vector.load %arg2[%c0_1, %c0_2] : memref<16x128xf32, #tpu.memory_space<vmem>>, vector<16x128xf32>
    %c0_3 = arith.constant 0 : index
    %c0_4 = arith.constant 0 : index
    %2 = vector.load %arg3[%c0_3, %c0_4] : memref<128x128xf32, #tpu.memory_space<vmem>>, vector<128x128xf32>
    %c0_5 = arith.constant 0 : index
    %c0_6 = arith.constant 0 : index
    %3 = vector.load %arg5[%c0_5, %c0_6] : memref<128x128xf32, #tpu.memory_space<vmem>>, vector<128x128xf32>
    %c0_7 = arith.constant 0 : index
    %c0_8 = arith.constant 0 : index
    %4 = vector.load %arg6[%c0_7, %c0_8] : memref<16x128xf32, #tpu.memory_space<vmem>>, vector<16x128xf32>
    %cst = arith.constant dense<0.000000e+00> : vector<64x128xf32>
    %5 = tpu.matmul %0, %1, %cst {dimension_numbers = #tpu.dot_dimension_numbers<[1], [0], [0], [1], [0, 0, 1, 1], [], []>} : vector<64x16xf32>, vector<16x128xf32>, vector<64x128xf32> -> vector<64x128xf32>
    %cst_9 = arith.constant 0.000000e+00 : f32
    %6 = vector.broadcast %cst_9 : f32 to vector<64x128xf32>
    %7 = arith.maximumf %5, %6 : vector<64x128xf32>
    %cst_10 = arith.constant dense<0.000000e+00> : vector<64x128xf32>
    %8 = tpu.matmul %7, %2, %cst_10 {dimension_numbers = #tpu.dot_dimension_numbers<[1], [0], [0], [1], [0, 0, 1, 1], [], []>} : vector<64x128xf32>, vector<128x128xf32>, vector<64x128xf32> -> vector<64x128xf32>
    %c0_11 = arith.constant 0 : index
    %c0_12 = arith.constant 0 : index
    %9 = vector.load %arg4[%c0_11, %c0_12] : memref<64x128xf32, #tpu.memory_space<vmem>>, vector<64x128xf32>
    %10 = arith.addf %8, %9 : vector<64x128xf32>
    %cst_13 = arith.constant 0.000000e+00 : f32
    %11 = vector.broadcast %cst_13 : f32 to vector<64x128xf32>
    %12 = arith.maximumf %10, %11 : vector<64x128xf32>
    %cst_14 = arith.constant dense<0.000000e+00> : vector<64x128xf32>
    %13 = tpu.matmul %12, %3, %cst_14 {dimension_numbers = #tpu.dot_dimension_numbers<[1], [0], [0], [1], [0, 0, 1, 1], [], []>} : vector<64x128xf32>, vector<128x128xf32>, vector<64x128xf32> -> vector<64x128xf32>
    %cst_15 = arith.constant dense<0.000000e+00> : vector<64x128xf32>
    %14 = tpu.matmul %0, %4, %cst_15 {dimension_numbers = #tpu.dot_dimension_numbers<[1], [0], [0], [1], [0, 0, 1, 1], [], []>} : vector<64x16xf32>, vector<16x128xf32>, vector<64x128xf32> -> vector<64x128xf32>
    %15 = arith.addf %13, %14 : vector<64x128xf32>
    %cst_16 = arith.constant 0.000000e+00 : f32
    %16 = vector.broadcast %cst_16 : f32 to vector<64x128xf32>
    %17 = arith.maximumf %15, %16 : vector<64x128xf32>
    %c0_17 = arith.constant 0 : index
    %c0_18 = arith.constant 0 : index
    %18 = vector.load %arg7[%c0_17, %c0_18] : memref<64x128xf32, #tpu.memory_space<vmem>>, vector<64x128xf32>
    tpu.vector_store %arg7[%c0_17, %c0_18], %17 {strides = array<i32>} : memref<64x128xf32, #tpu.memory_space<vmem>>, vector<64x128xf32>,
    return
  }
  func.func @transform_0(%arg0: i32) -> (i32, i32) {
    %c0_i32 = arith.constant 0 : i32
    %c0_i32_0 = arith.constant 0 : i32
    return %arg0, %c0_i32 : i32, i32
  }
  func.func @transform_1(%arg0: i32) -> (i32, i32) {
    %c0_i32 = arith.constant 0 : i32
    %c0_i32_0 = arith.constant 0 : i32
    %c0_i32_1 = arith.constant 0 : i32
    return %c0_i32, %c0_i32_0 : i32, i32
  }
  func.func @transform_2(%arg0: i32) -> (i32, i32) {
    %c0_i32 = arith.constant 0 : i32
    %c0_i32_0 = arith.constant 0 : i32
    %c0_i32_1 = arith.constant 0 : i32
    return %c0_i32, %c0_i32_0 : i32, i32
  }
  func.func @transform_3(%arg0: i32) -> (i32, i32) {
    %c0_i32 = arith.constant 0 : i32
    %c0_i32_0 = arith.constant 0 : i32
    %c0_i32_1 = arith.constant 0 : i32
    return %c0_i32, %c0_i32_0 : i32, i32
  }
  func.func @transform_4(%arg0: i32) -> (i32, i32) {
    %c0_i32 = arith.constant 0 : i32
    %c0_i32_0 = arith.constant 0 : i32
    %c0_i32_1 = arith.constant 0 : i32
    return %c0_i32, %c0_i32_0 : i32, i32
  }
  func.func @transform_5(%arg0: i32) -> (i32, i32) {
    %c0_i32 = arith.constant 0 : i32
    %c0_i32_0 = arith.constant 0 : i32
    %c0_i32_1 = arith.constant 0 : i32
    return %c0_i32, %c0_i32_0 : i32, i32
  }
  func.func @transform_6(%arg0: i32) -> (i32, i32) {
    %c0_i32 = arith.constant 0 : i32
    %c0_i32_0 = arith.constant 0 : i32
    return %arg0, %c0_i32 : i32, i32
  }
}

</mosaic_0001>

<llo_original>
// kernel: tpu_custom_call.1
$region0: #{tpu_custom_call.1}
  #allocation0 [shape = 'u32[]', space=smem, size = 0x4, offset = 0x4, fixed_abs, tag = 'smem constant byte address 0x4 - core index']
  #allocation1 [shape = 'u32[144,128]{1,0:T(1,128)}', space=vmem, size = 0x12000, scoped, tag = 'internal scratch']
  %s0 = inlined_call_operand.vmem [shape: f32[128,16], index: 0, kind: input, shape index: {}]
  %s1 = inlined_call_operand.vmem [shape: f32[16,128], index: 1, kind: input, shape index: {}]
  %s2 = inlined_call_operand.vmem [shape: f32[128,128], index: 2, kind: input, shape index: {}]
  %s3 = inlined_call_operand.hbm [shape: f32[64,128], index: 3, kind: input, shape index: {}]
  %s4 = inlined_call_operand.hbm [shape: f32[128,128], index: 4, kind: input, shape index: {}]
  %s5 = inlined_call_operand.vmem [shape: f32[16,128], index: 5, kind: input, shape index: {}]
  %s6 = inlined_call_operand.hbm [shape: f32[128,128], index: 6, kind: output, shape index: {}]
  %s7 = sld [smem:[#allocation0]]
  $region65: #{tpu_custom_call.1} parent=0
    _
  %s9 = ssub.s32 1, %s7
  %s10 = scalar_select 0, %s9, %s7
  $region1: #{tpu_custom_call.1} parent=0
    #allocation2 [shape = 'u8[32768]{0}', space=vmem, size = 0x8000, scoped, tag = 'input window, operand 3, single buffered']
    #allocation3 [shape = 's32[2]{0}', space=sflag, size = 0x8, scoped, tag = 'scoped memory for tpu_custom_call.1']
    #allocation4 [shape = 's32[2]{0}', space=sflag, size = 0x8, scoped, tag = 'scoped memory for tpu_custom_call.1']
    #allocation5 [shape = 'u8[65536]{0}', space=vmem, size = 0x10000, scoped, tag = 'input window, operand 4, single buffered']
    #allocation6 [shape = 's32[1]{0}', space=sflag, size = 0x4, scoped, tag = 'scoped memory for tpu_custom_call.1']
    #allocation7 [shape = 'u8[65536]{0}', space=vmem, size = 0x10000, scoped, tag = 'output window, operand 0']
    %11 = vsyncpa [#allocation3], 0
    %12 = vsyncpa [#allocation6], 0
    %13 = vsyncpa [#allocation4], 0
    %s14 = scalar_lea.sflag [#allocation4], 1
    %15 = vsyncpa %s14, 0
    loop: start=0, step=1, limit=4
    $region2: #{tpu_custom_call.1} parent=1 // loop_pre_header
      _
    $region3: #{tpu_custom_call.1} parent=1 // loop_header
      %s17 = sphi 0, %s21
      %p18 = scmp.ge.s32.totalorder %s17, 4
      %s27 = sphi 0, %s29
      %s30 = sphi 0, %s27
      %s31 = sphi 0, %s30
      %s47 = sphi 0, %s31
      %s51 = sphi 0, %s51
      %s53 = sphi 0, %s51
      %s54 = sphi 0, %s53
      %s68 = sphi 0, %s54
      %s72 = sphi 0, %s72
      %s74 = sphi 0, %s72
      %s75 = sphi 0, %s74
      %s89 = sphi 0, %s75
      %s93 = sphi 0, %s93
      %s95 = sphi 0, %s93
      %s96 = sphi 0, %s95
      %s110 = sphi 0, %s96
      %s114 = sphi 0, %s114
      %s116 = sphi 0, %s114
      %s117 = sphi 0, %s116
      %s131 = sphi 0, %s117
      %s135 = sphi 0, %s135
      %s137 = sphi 0, %s135
      %s138 = sphi 0, %s137
      %s152 = sphi 0, %s138
      %s158 = sphi 0, %s160
      %s161 = sphi 0, %s158
      %s162 = sphi 0, %s161
      %s178 = sphi 0, %s162
    $region4: #{tpu_custom_call.1} parent=1 // loop_header_branch
      %20 = sbr.rel (%p18) target = $region8
    $region5: #{tpu_custom_call.1} parent=1 // loop_body
      %s22 = ssub.s32 %s17, 1
      %s23 = ssub.s32 %s17, 2
      %s24 = sadd.s32 %s17, 1
      %s25 = ssub.s32 %s17, %s24
      %p26 = scmp.eq.s32.totalorder %s25, 0
      %s28 = sadd.s32 %s27, 1
      %s29 = scalar_select %p26, %s27, %s28
      %p32 = pneg %p26
      %p33 = scmp.eq.s32.totalorder %s17, 1
      %p34 = por %p32, %p33
      %p35 = scmp.ne.s32.totalorder %s27, %s30
      %p36 = scmp.eq.s32.totalorder %s17, 0
      %p37 = por %p35, %p36
      %p38 = scmp.ne.s32.totalorder %s27, %s30
      %p39 = scmp.eq.s32.totalorder %s22, 1
      %p40 = por %p38, %p39
      %p41 = scmp.ne.s32.totalorder %s30, %s31
      %p42 = scmp.eq.s32.totalorder %s22, 0
      %p43 = por %p41, %p42
      %p44 = scmp.ne.s32.totalorder %s30, %s31
      %p45 = scmp.eq.s32.totalorder %s23, 1
      %p46 = por %p44, %p45
      %p48 = scmp.ne.s32.totalorder %s31, %s47
      %p49 = scmp.eq.s32.totalorder %s23, 0
      %p50 = por %p48, %p49
      %s52 = sadd.s32 %s51, 1
      %p55 = scmp.eq.s32.totalorder %s17, 1
      %p56 = scmp.ne.s32.totalorder %s51, %s53
      %p57 = scmp.eq.s32.totalorder %s17, 0
      %p58 = por %p56, %p57
      %p59 = scmp.ne.s32.totalorder %s51, %s53
      %p60 = scmp.eq.s32.totalorder %s22, 1
      %p61 = por %p59, %p60
      %p62 = scmp.ne.s32.totalorder %s53, %s54
      %p63 = scmp.eq.s32.totalorder %s22, 0
      %p64 = por %p62, %p63
      %p65 = scmp.ne.s32.totalorder %s53, %s54
      %p66 = scmp.eq.s32.totalorder %s23, 1
      %p67 = por %p65, %p66
      %p69 = scmp.ne.s32.totalorder %s54, %s68
      %p70 = scmp.eq.s32.totalorder %s23, 0
      %p71 = por %p69, %p70
      %s73 = sadd.s32 %s72, 1
      %p76 = scmp.eq.s32.totalorder %s17, 1
      %p77 = scmp.ne.s32.totalorder %s72, %s74
      %p78 = scmp.eq.s32.totalorder %s17, 0
      %p79 = por %p77, %p78
      %p80 = scmp.ne.s32.totalorder %s72, %s74
      %p81 = scmp.eq.s32.totalorder %s22, 1
      %p82 = por %p80, %p81
      %p83 = scmp.ne.s32.totalorder %s74, %s75
      %p84 = scmp.eq.s32.totalorder %s22, 0
      %p85 = por %p83, %p84
      %p86 = scmp.ne.s32.totalorder %s74, %s75
      %p87 = scmp.eq.s32.totalorder %s23, 1
      %p88 = por %p86, %p87
      %p90 = scmp.ne.s32.totalorder %s75, %s89
      %p91 = scmp.eq.s32.totalorder %s23, 0
      %p92 = por %p90, %p91
      %s94 = sadd.s32 %s93, 1
      %p97 = scmp.eq.s32.totalorder %s17, 1
      %p98 = scmp.ne.s32.totalorder %s93, %s95
      %p99 = scmp.eq.s32.totalorder %s17, 0
      %p100 = por %p98, %p99
      %p101 = scmp.ne.s32.totalorder %s93, %s95
      %p102 = scmp.eq.s32.totalorder %s22, 1
      %p103 = por %p101, %p102
      %p104 = scmp.ne.s32.totalorder %s95, %s96
      %p105 = scmp.eq.s32.totalorder %s22, 0
      %p106 = por %p104, %p105
      %p107 = scmp.ne.s32.totalorder %s95, %s96
      %p108 = scmp.eq.s32.totalorder %s23, 1
      %p109 = por %p107, %p108
      %p111 = scmp.ne.s32.totalorder %s96, %s110
      %p112 = scmp.eq.s32.totalorder %s23, 0
      %p113 = por %p111, %p112
      %s115 = sadd.s32 %s114, 1
      %p118 = scmp.eq.s32.totalorder %s17, 1
      %p119 = scmp.ne.s32.totalorder %s114, %s116
      %p120 = scmp.eq.s32.totalorder %s17, 0
      %p121 = por %p119, %p120
      %p122 = scmp.ne.s32.totalorder %s114, %s116
      %p123 = scmp.eq.s32.totalorder %s22, 1
      %p124 = por %p122, %p123
      %p125 = scmp.ne.s32.totalorder %s116, %s117
      %p126 = scmp.eq.s32.totalorder %s22, 0
      %p127 = por %p125, %p126
      %p128 = scmp.ne.s32.totalorder %s116, %s117
      %p129 = scmp.eq.s32.totalorder %s23, 1
      %p130 = por %p128, %p129
      %p132 = scmp.ne.s32.totalorder %s117, %s131
      %p133 = scmp.eq.s32.totalorder %s23, 0
      %p134 = por %p132, %p133
      %s136 = sadd.s32 %s135, 1
      %p139 = scmp.eq.s32.totalorder %s17, 1
      %p140 = scmp.ne.s32.totalorder %s135, %s137
      %p141 = scmp.eq.s32.totalorder %s17, 0
      %p142 = por %p140, %p141
      %p143 = scmp.ne.s32.totalorder %s135, %s137
      %p144 = scmp.eq.s32.totalorder %s22, 1
      %p145 = por %p143, %p144
      %p146 = scmp.ne.s32.totalorder %s137, %s138
      %p147 = scmp.eq.s32.totalorder %s22, 0
      %p148 = por %p146, %p147
      %p149 = scmp.ne.s32.totalorder %s137, %s138
      %p150 = scmp.eq.s32.totalorder %s23, 1
      %p151 = por %p149, %p150
      %p153 = scmp.ne.s32.totalorder %s138, %s152
      %p154 = scmp.eq.s32.totalorder %s23, 0
      %p155 = por %p153, %p154
      %s156 = ssub.s32 %s17, %s24
      %p157 = scmp.eq.s32.totalorder %s156, 0
      %s159 = sadd.s32 %s158, 1
      %s160 = scalar_select %p157, %s158, %s159
      %p163 = pneg %p157
      %p164 = scmp.eq.s32.totalorder %s17, 1
      %p165 = por %p163, %p164
      %p166 = scmp.ne.s32.totalorder %s158, %s161
      %p167 = scmp.eq.s32.totalorder %s17, 0
      %p168 = por %p166, %p167
      %p169 = scmp.ne.s32.totalorder %s158, %s161
      %p170 = scmp.eq.s32.totalorder %s22, 1
      %p171 = por %p169, %p170
      %p172 = scmp.ne.s32.totalorder %s161, %s162
      %p173 = scmp.eq.s32.totalorder %s22, 0
      %p174 = por %p172, %p173
      %p175 = scmp.ne.s32.totalorder %s161, %s162
      %p176 = scmp.eq.s32.totalorder %s23, 1
      %p177 = por %p175, %p176
      %p179 = scmp.ne.s32.totalorder %s162, %s178
      %p180 = scmp.eq.s32.totalorder %s23, 0
      %p181 = por %p179, %p180
      %p182 = scmp.le.s32.totalorder 1, %s17
      %p183 = scmp.lt.s32.totalorder %s17, 3
      %p184 = pnand %p182, %p183
      %p185 = pneg %p184
      // Predicated region
      $region9: #{tpu_custom_call.1} parent=5 // pred_check
        _
      $region10: #{tpu_custom_call.1} parent=5 // pred_check_branch
        %187 = sbr.rel (%p184) target = $region12
      $region11: #{tpu_custom_call.1} parent=5 // pred_region
        %s188 = ssub.s32 %s17, 1
        // Predicated region
        $region13: #{tpu_custom_call.1} parent=11 // pred_check
          %p189 = pneg %p64
        $region14: #{tpu_custom_call.1} parent=11 // pred_check_branch
          %191 = sbr.rel (%p189) target = $region16
        $region15: #{tpu_custom_call.1} parent=11 // pred_region
          _
        $region16: #{tpu_custom_call.1} parent=11 // pred_fallthru
          _
        // Predicated region
        $region17: #{tpu_custom_call.1} parent=11 // pred_check
          %p192 = pneg %p85
        $region18: #{tpu_custom_call.1} parent=11 // pred_check_branch
          %194 = sbr.rel (%p192) target = $region20
        $region19: #{tpu_custom_call.1} parent=11 // pred_region
          _
        $region20: #{tpu_custom_call.1} parent=11 // pred_fallthru
          _
        // Predicated region
        $region21: #{tpu_custom_call.1} parent=11 // pred_check
          %p195 = pneg %p106
        $region22: #{tpu_custom_call.1} parent=11 // pred_check_branch
          %197 = sbr.rel (%p195) target = $region24
        $region23: #{tpu_custom_call.1} parent=11 // pred_region
          %s199 = ssub.s32 1024, 1024
          %200 = vsyncadd [#allocation3], %s199
          %s201 = sshll.u32 [#allocation2], 4
          %s202 = int_to_ptr.vmem [resolvable:$true] %s201
          %207 = dma.hbm_to_vmem [thread:$0]  %s3, 1024, %s202, [#allocation3], 128, 128, 8
        $region24: #{tpu_custom_call.1} parent=11 // pred_fallthru
          _
        // Predicated region
        $region25: #{tpu_custom_call.1} parent=11 // pred_check
          %p208 = pneg %p127
        $region26: #{tpu_custom_call.1} parent=11 // pred_check_branch
          %210 = sbr.rel (%p208) target = $region28
        $region27: #{tpu_custom_call.1} parent=11 // pred_region
          %s212 = ssub.s32 2048, 2048
          %213 = vsyncadd [#allocation6], %s212
          %s214 = sshll.u32 [#allocation5], 4
          %s215 = int_to_ptr.vmem [resolvable:$true] %s214
          %220 = dma.hbm_to_vmem [thread:$0]  %s4, 2048, %s215, [#allocation6], 128, 128, 8
        $region28: #{tpu_custom_call.1} parent=11 // pred_fallthru
          _
        // Predicated region
        $region29: #{tpu_custom_call.1} parent=11 // pred_check
          %p221 = pneg %p148
        $region30: #{tpu_custom_call.1} parent=11 // pred_check_branch
          %223 = sbr.rel (%p221) target = $region32
        $region31: #{tpu_custom_call.1} parent=11 // pred_region
          _
        $region32: #{tpu_custom_call.1} parent=11 // pred_fallthru
          _
      $region12: #{tpu_custom_call.1} parent=5 // pred_fallthru
        _
      %p224 = scmp.lt.s32.totalorder %s17, 2
      // Predicated region
      $region33: #{tpu_custom_call.1} parent=5 // pred_check
        %p225 = pneg %p224
      $region34: #{tpu_custom_call.1} parent=5 // pred_check_branch
        %227 = sbr.rel (%p225) target = $region36
      $region35: #{tpu_custom_call.1} parent=5 // pred_region
        // Predicated region
        $region37: #{tpu_custom_call.1} parent=35 // pred_check
          %p228 = pneg %p37
        $region38: #{tpu_custom_call.1} parent=35 // pred_check_branch
          %230 = sbr.rel (%p228) target = $region40
        $region39: #{tpu_custom_call.1} parent=35 // pred_region
          %s231 = smul.u32 8, %s17
          %p232 = scmp.lt.s32.totalorder %s231, 15
          %s233 = scalar_select %p232, %s231, 15
          %s234 = smul.addr %s233, 8
          %s235 = scalar_lea.vmem %s0, %s234
          %s236 = smul.u32 8, %s17
        $region40: #{tpu_custom_call.1} parent=35 // pred_fallthru
          _
      $region36: #{tpu_custom_call.1} parent=5 // pred_fallthru
        _
      %p237 = scmp.le.s32.totalorder 1, %s17
      %p238 = scmp.lt.s32.totalorder %s17, 3
      %p239 = pnand %p237, %p238
      %p240 = pneg %p239
      // Predicated region
      $region41: #{tpu_custom_call.1} parent=5 // pred_check
        _
      $region42: #{tpu_custom_call.1} parent=5 // pred_check_branch
        %242 = sbr.rel (%p239) target = $region44
      $region43: #{tpu_custom_call.1} parent=5 // pred_region
        %s243 = ssub.s32 %s17, 1
        // Predicated region
        $region45: #{tpu_custom_call.1} parent=43 // pred_check
          %p244 = pneg %p106
        $region46: #{tpu_custom_call.1} parent=43 // pred_check_branch
          %246 = sbr.rel (%p244) target = $region48
        $region47: #{tpu_custom_call.1} parent=43 // pred_region
          %247 = dma.done [#allocation3], 1024
        $region48: #{tpu_custom_call.1} parent=43 // pred_fallthru
          _
        // Predicated region
        $region49: #{tpu_custom_call.1} parent=43 // pred_check
          %p248 = pneg %p127
        $region50: #{tpu_custom_call.1} parent=43 // pred_check_branch
          %250 = sbr.rel (%p248) target = $region52
        $region51: #{tpu_custom_call.1} parent=43 // pred_region
          %251 = dma.done [#allocation6], 2048
        $region52: #{tpu_custom_call.1} parent=43 // pred_fallthru
          _
        %s252 = smul.u32 8, %s22
        %p253 = scmp.lt.s32.totalorder %s252, 15
        %s254 = scalar_select %p253, %s252, 15
        %s255 = smul.addr %s254, 8
        %s256 = scalar_lea.vmem %s0, %s255
        %p257 = pneg %p43
        %p258 = pneg %p40
        %p259 = pneg %p64
        %p260 = pneg %p61
        %p261 = pneg %p85
        %p262 = pneg %p82
        %p263 = pneg %p106
        %p264 = pneg %p103
        %p265 = pneg %p127
        %p266 = pneg %p124
        %p267 = pneg %p148
        %p268 = pneg %p145
        %p269 = pneg %p174
        %p270 = pneg %p171
        %s271 = sand.u32 %s161, 1
        %s272 = scalar_lea.sflag [#allocation4], %s271
        %s273 = sand.u32 %s161, 1
        %s274 = smul.addr %s273, 64
        %s275 = scalar_lea.vmem [#allocation7], %s274
        %s276 = smul.u32 8, %s22
        %p277 = scmp.lt.s32.totalorder %s276, 15
        %s278 = scalar_select %p277, %s276, 15
        %s279 = smul.addr %s278, 8
        %s280 = scalar_lea.vmem %s0, %s279
        %s281 = smul.u32 8, %s22
        %s282 = smul.u32 8, %s22
        %v283 = vld [vmem:[%s280] sm:$0xff]
        %v284 = vld [vmem:[%s280 + $0x8] sm:$0xff]
        %v285 = vld [vmem:[%s280 + $0x10] sm:$0xff]
        %v286 = vld [vmem:[%s280 + $0x18] sm:$0xff]
        %v287 = vld [vmem:[%s280 + $0x20] sm:$0xff]
        %v288 = vld [vmem:[%s280 + $0x28] sm:$0xff]
        %v289 = vld [vmem:[%s280 + $0x30] sm:$0xff]
        %v290 = vld [vmem:[%s280 + $0x38] sm:$0xff]
        %v291 = vld [vmem:[%s1] sm:$0xff]
        %v292 = vld [vmem:[%s1 + $0x8] sm:$0xff]
        %v293 = vld [vmem:[%s2] sm:$0xff]
        %v294 = vld [vmem:[%s2 + $0x8] sm:$0xff]
        %v295 = vld [vmem:[%s2 + $0x10] sm:$0xff]
        %v296 = vld [vmem:[%s2 + $0x18] sm:$0xff]
        %v297 = vld [vmem:[%s2 + $0x20] sm:$0xff]
        %v298 = vld [vmem:[%s2 + $0x28] sm:$0xff]
        %v299 = vld [vmem:[%s2 + $0x30] sm:$0xff]
        %v300 = vld [vmem:[%s2 + $0x38] sm:$0xff]
        %v301 = vld [vmem:[%s2 + $0x40] sm:$0xff]
        %v302 = vld [vmem:[%s2 + $0x48] sm:$0xff]
        %v303 = vld [vmem:[%s2 + $0x50] sm:$0xff]
        %v304 = vld [vmem:[%s2 + $0x58] sm:$0xff]
        %v305 = vld [vmem:[%s2 + $0x60] sm:$0xff]
        %v306 = vld [vmem:[%s2 + $0x68] sm:$0xff]
        %v307 = vld [vmem:[%s2 + $0x70] sm:$0xff]
        %v308 = vld [vmem:[%s2 + $0x78] sm:$0xff]
        %v309 = vld [vmem:[#allocation5] sm:$0xff]
        %v310 = vld [vmem:[#allocation5 + $0x8] sm:$0xff]
        %v311 = vld [vmem:[#allocation5 + $0x10] sm:$0xff]
        %v312 = vld [vmem:[#allocation5 + $0x18] sm:$0xff]
        %v313 = vld [vmem:[#allocation5 + $0x20] sm:$0xff]
        %v314 = vld [vmem:[#allocation5 + $0x28] sm:$0xff]
        %v315 = vld [vmem:[#allocation5 + $0x30] sm:$0xff]
        %v316 = vld [vmem:[#allocation5 + $0x38] sm:$0xff]
        %v317 = vld [vmem:[#allocation5 + $0x40] sm:$0xff]
        %v318 = vld [vmem:[#allocation5 + $0x48] sm:$0xff]
        %v319 = vld [vmem:[#allocation5 + $0x50] sm:$0xff]
        %v320 = vld [vmem:[#allocation5 + $0x58] sm:$0xff]
        %v321 = vld [vmem:[#allocation5 + $0x60] sm:$0xff]
        %v322 = vld [vmem:[#allocation5 + $0x68] sm:$0xff]
        %v323 = vld [vmem:[#allocation5 + $0x70] sm:$0xff]
        %v324 = vld [vmem:[#allocation5 + $0x78] sm:$0xff]
        %v325 = vld [vmem:[%s5] sm:$0xff]
        %v326 = vld [vmem:[%s5 + $0x8] sm:$0xff]
        %vm327 = vcmask 130048
        %v329 = vsel %vm327, %v283, 0
        %v332 = vsel %vm327, %v284, 0
        %v335 = vsel %vm327, %v285, 0
        %v338 = vsel %vm327, %v286, 0
        %v341 = vsel %vm327, %v287, 0
        %v344 = vsel %vm327, %v288, 0
        %v347 = vsel %vm327, %v289, 0
        %v350 = vsel %vm327, %v290, 0
        %352 = vmatprep.subr.mxu0 0.0
        %353 = vmatpush1.msra.mxu0 %v291
        %354 = vmatprep.subr.mxu0 0.0
        %355 = vmatpush1.msra.mxu0 %v292
        %356 = vmatprep.subr.mxu0 0.0
        %357 = vmatpush1.msra.mxu0 0.0
        %358 = vmatprep.subr.mxu0 0.0
        %359 = vmatpush1.msra.mxu0 0.0
        %360 = vmatprep.subr.mxu0 0.0
        %361 = vmatpush1.msra.mxu0 0.0
        %362 = vmatprep.subr.mxu0 0.0
        %363 = vmatpush1.msra.mxu0 0.0
        %364 = vmatprep.subr.mxu0 0.0
        %365 = vmatpush1.msra.mxu0 0.0
        %366 = vmatprep.subr.mxu0 0.0
        %367 = vmatpush1.msra.mxu0 0.0
        %368 = vmatprep.subr.mxu0 0.0
        %369 = vmatpush1.msra.mxu0 0.0
        %370 = vmatprep.subr.mxu0 0.0
        %371 = vmatpush1.msra.mxu0 0.0
        %372 = vmatprep.subr.mxu0 0.0
        %373 = vmatpush1.msra.mxu0 0.0
        %374 = vmatprep.subr.mxu0 0.0
        %375 = vmatpush1.msra.mxu0 0.0
        %376 = vmatprep.subr.mxu0 0.0
        %377 = vmatpush1.msra.mxu0 0.0
        %378 = vmatprep.subr.mxu0 0.0
        %379 = vmatpush1.msra.mxu0 0.0
        %380 = vmatprep.subr.mxu0 0.0
        %381 = vmatpush1.msra.mxu0 0.0
        %382 = vmatprep.subr.mxu0 0.0
        %383 = vmatpush1.msra.mxu0 0.0
        %384 = vmatprep.subr.mxu0 0.0
        %385 = vmatpush1.msra.mxu0 0.0
        %386 = vmatprep.subr.mxu0 0.0
        %387 = vmatpush1.msra.mxu0 0.0
        %388 = vmatprep.subr.mxu0 0.0
        %389 = vmatpush1.msra.mxu0 0.0
        %390 = vmatprep.subr.mxu0 0.0
        %391 = vmatpush1.msra.mxu0 0.0
        %392 = vmatprep.subr.mxu0 0.0
        %393 = vmatpush1.msra.mxu0 0.0
        %394 = vmatprep.subr.mxu0 0.0
        %395 = vmatpush1.msra.mxu0 0.0
        %396 = vmatprep.subr.mxu0 0.0
        %397 = vmatpush1.msra.mxu0 0.0
        %398 = vmatprep.subr.mxu0 0.0
        %399 = vmatpush1.msra.mxu0 0.0
        %400 = vmatprep.subr.mxu0 0.0
        %401 = vmatpush1.msra.mxu0 0.0
        %402 = vmatprep.subr.mxu0 0.0
        %403 = vmatpush1.msra.mxu0 0.0
        %404 = vmatprep.subr.mxu0 0.0
        %405 = vmatpush1.msra.mxu0 0.0
        %406 = vmatprep.subr.mxu0 0.0
        %407 = vmatpush1.msra.mxu0 0.0
        %408 = vmatprep.subr.mxu0 0.0
        %409 = vmatpush1.msra.mxu0 0.0
        %410 = vmatprep.subr.mxu0 0.0
        %411 = vmatpush1.msra.mxu0 0.0
        %412 = vmatprep.subr.mxu0 0.0
        %413 = vmatpush1.msra.mxu0 0.0
        %414 = vmatprep.subr.mxu0 0.0
        %415 = vmatpush1.msra.mxu0 0.0
        %416 = vmatprep.mubr.f32.mxu0 0.0
        %417 = vmatmul.mubr.f32.gmra.mrb[0].mxu0 %v329
        %v418 = vpop.f32.mrb[0].mxu0
        %v419 = vadd.f32 0.0, %v418
        %v420 = vpop.f32.mrb[0].mxu0
        %421 = vmatprep.mubr.f32.mxu0 0.0
        %422 = vmatmul.mubr.f32.gmra.mrb[0].mxu0 %v332
        %v423 = vpop.f32.mrb[0].mxu0
        %v424 = vadd.f32 0.0, %v423
        %v425 = vpop.f32.mrb[0].mxu0
        %426 = vmatprep.mubr.f32.mxu0 0.0
        %427 = vmatmul.mubr.f32.gmra.mrb[0].mxu0 %v335
        %v428 = vpop.f32.mrb[0].mxu0
        %v429 = vadd.f32 0.0, %v428
        %v430 = vpop.f32.mrb[0].mxu0
        %431 = vmatprep.mubr.f32.mxu0 0.0
        %432 = vmatmul.mubr.f32.gmra.mrb[0].mxu0 %v338
        %v433 = vpop.f32.mrb[0].mxu0
        %v434 = vadd.f32 0.0, %v433
        %v435 = vpop.f32.mrb[0].mxu0
        %436 = vmatprep.mubr.f32.mxu0 0.0
        %437 = vmatmul.mubr.f32.gmra.mrb[0].mxu0 %v341
        %v438 = vpop.f32.mrb[0].mxu0
        %v439 = vadd.f32 0.0, %v438
        %v440 = vpop.f32.mrb[0].mxu0
        %441 = vmatprep.mubr.f32.mxu0 0.0
        %442 = vmatmul.mubr.f32.gmra.mrb[0].mxu0 %v344
        %v443 = vpop.f32.mrb[0].mxu0
        %v444 = vadd.f32 0.0, %v443
        %v445 = vpop.f32.mrb[0].mxu0
        %446 = vmatprep.mubr.f32.mxu0 0.0
        %447 = vmatmul.mubr.f32.gmra.mrb[0].mxu0 %v347
        %v448 = vpop.f32.mrb[0].mxu0
        %v449 = vadd.f32 0.0, %v448
        %v450 = vpop.f32.mrb[0].mxu0
        %451 = vmatprep.mubr.f32.mxu0 0.0
        %452 = vmatmul.mubr.f32.gmra.mrb[0].mxu0 %v350
        %v453 = vpop.f32.mrb[0].mxu0
        %v454 = vadd.f32 0.0, %v453
        %v455 = vpop.f32.mrb[0].mxu0
        %456 = vdwg.mxu0
        %v457 = vmax.f32 %v419, 0.0
        %v458 = vmax.f32 %v424, 0.0
        %v459 = vmax.f32 %v429, 0.0
        %v460 = vmax.f32 %v434, 0.0
        %v461 = vmax.f32 %v439, 0.0
        %v462 = vmax.f32 %v444, 0.0
        %v463 = vmax.f32 %v449, 0.0
        %v464 = vmax.f32 %v454, 0.0
        %v465 = vld [vmem:[#allocation2] sm:$0xff]
        %v466 = vld [vmem:[#allocation2 + $0x8] sm:$0xff]
        %v467 = vld [vmem:[#allocation2 + $0x10] sm:$0xff]
        %v468 = vld [vmem:[#allocation2 + $0x18] sm:$0xff]
        %v469 = vld [vmem:[#allocation2 + $0x20] sm:$0xff]
        %v470 = vld [vmem:[#allocation2 + $0x28] sm:$0xff]
        %v471 = vld [vmem:[#allocation2 + $0x30] sm:$0xff]
        %v472 = vld [vmem:[#allocation2 + $0x38] sm:$0xff]
        %473 = vmatprep.subr.mxu0 0.0
        %474 = vmatpush1.msra.mxu0 %v293
        %475 = vmatprep.subr.mxu0 0.0
        %476 = vmatpush1.msra.mxu0 %v294
        %477 = vmatprep.subr.mxu0 0.0
        %478 = vmatpush1.msra.mxu0 %v295
        %479 = vmatprep.subr.mxu0 0.0
        %480 = vmatpush1.msra.mxu0 %v296
        %481 = vmatprep.subr.mxu0 0.0
        %482 = vmatpush1.msra.mxu0 %v297
        %483 = vmatprep.subr.mxu0 0.0
        %484 = vmatpush1.msra.mxu0 %v298
        %485 = vmatprep.subr.mxu0 0.0
        %486 = vmatpush1.msra.mxu0 %v299
        %487 = vmatprep.subr.mxu0 0.0
        %488 = vmatpush1.msra.mxu0 %v300
        %489 = vmatprep.subr.mxu0 0.0
        %490 = vmatpush1.msra.mxu0 %v301
        %491 = vmatprep.subr.mxu0 0.0
        %492 = vmatpush1.msra.mxu0 %v302
        %493 = vmatprep.subr.mxu0 0.0
        %494 = vmatpush1.msra.mxu0 %v303
        %495 = vmatprep.subr.mxu0 0.0
        %496 = vmatpush1.msra.mxu0 %v304
        %497 = vmatprep.subr.mxu0 0.0
        %498 = vmatpush1.msra.mxu0 %v305
        %499 = vmatprep.subr.mxu0 0.0
        %500 = vmatpush1.msra.mxu0 %v306
        %501 = vmatprep.subr.mxu0 0.0
        %502 = vmatpush1.msra.mxu0 %v307
        %503 = vmatprep.subr.mxu0 0.0
        %504 = vmatpush1.msra.mxu0 %v308
        %505 = vmatprep.subr.mxu0 0.0
        %506 = vmatpush1.msra.mxu0 0.0
        %507 = vmatprep.subr.mxu0 0.0
        %508 = vmatpush1.msra.mxu0 0.0
        %509 = vmatprep.subr.mxu0 0.0
        %510 = vmatpush1.msra.mxu0 0.0
        %511 = vmatprep.subr.mxu0 0.0
        %512 = vmatpush1.msra.mxu0 0.0
        %513 = vmatprep.subr.mxu0 0.0
        %514 = vmatpush1.msra.mxu0 0.0
        %515 = vmatprep.subr.mxu0 0.0
        %516 = vmatpush1.msra.mxu0 0.0
        %517 = vmatprep.subr.mxu0 0.0
        %518 = vmatpush1.msra.mxu0 0.0
        %519 = vmatprep.subr.mxu0 0.0
        %520 = vmatpush1.msra.mxu0 0.0
        %521 = vmatprep.subr.mxu0 0.0
        %522 = vmatpush1.msra.mxu0 0.0
        %523 = vmatprep.subr.mxu0 0.0
        %524 = vmatpush1.msra.mxu0 0.0
        %525 = vmatprep.subr.mxu0 0.0
        %526 = vmatpush1.msra.mxu0 0.0
        %527 = vmatprep.subr.mxu0 0.0
        %528 = vmatpush1.msra.mxu0 0.0
        %529 = vmatprep.subr.mxu0 0.0
        %530 = vmatpush1.msra.mxu0 0.0
        %531 = vmatprep.subr.mxu0 0.0
        %532 = vmatpush1.msra.mxu0 0.0
        %533 = vmatprep.subr.mxu0 0.0
        %534 = vmatpush1.msra.mxu0 0.0
        %535 = vmatprep.subr.mxu0 0.0
        %536 = vmatpush1.msra.mxu0 0.0
        %537 = vmatprep.mubr.f32.mxu0 0.0
        %538 = vmatmul.mubr.f32.gmra.mrb[0].mxu0 %v457
        %v539 = vpop.f32.mrb[0].mxu0
        %v540 = vadd.f32 %v465, %v539
        %v541 = vpop.f32.mrb[0].mxu0
        %542 = vmatprep.mubr.f32.mxu0 0.0
        %543 = vmatmul.mubr.f32.gmra.mrb[0].mxu0 %v458
        %v544 = vpop.f32.mrb[0].mxu0
        %v545 = vadd.f32 %v466, %v544
        %v546 = vpop.f32.mrb[0].mxu0
        %547 = vmatprep.mubr.f32.mxu0 0.0
        %548 = vmatmul.mubr.f32.gmra.mrb[0].mxu0 %v459
        %v549 = vpop.f32.mrb[0].mxu0
        %v550 = vadd.f32 %v467, %v549
        %v551 = vpop.f32.mrb[0].mxu0
        %552 = vmatprep.mubr.f32.mxu0 0.0
        %553 = vmatmul.mubr.f32.gmra.mrb[0].mxu0 %v460
        %v554 = vpop.f32.mrb[0].mxu0
        %v555 = vadd.f32 %v468, %v554
        %v556 = vpop.f32.mrb[0].mxu0
        %557 = vmatprep.mubr.f32.mxu0 0.0
        %558 = vmatmul.mubr.f32.gmra.mrb[0].mxu0 %v461
        %v559 = vpop.f32.mrb[0].mxu0
        %v560 = vadd.f32 %v469, %v559
        %v561 = vpop.f32.mrb[0].mxu0
        %562 = vmatprep.mubr.f32.mxu0 0.0
        %563 = vmatmul.mubr.f32.gmra.mrb[0].mxu0 %v462
        %v564 = vpop.f32.mrb[0].mxu0
        %v565 = vadd.f32 %v470, %v564
        %v566 = vpop.f32.mrb[0].mxu0
        %567 = vmatprep.mubr.f32.mxu0 0.0
        %568 = vmatmul.mubr.f32.gmra.mrb[0].mxu0 %v463
        %v569 = vpop.f32.mrb[0].mxu0
        %v570 = vadd.f32 %v471, %v569
        %v571 = vpop.f32.mrb[0].mxu0
        %572 = vmatprep.mubr.f32.mxu0 0.0
        %573 = vmatmul.mubr.f32.gmra.mrb[0].mxu0 %v464
        %v574 = vpop.f32.mrb[0].mxu0
        %v575 = vadd.f32 %v472, %v574
        %v576 = vpop.f32.mrb[0].mxu0
        %577 = vdwg.mxu0
        %v578 = vmax.f32 %v540, 0.0
        %v579 = vmax.f32 %v545, 0.0
        %v580 = vmax.f32 %v550, 0.0
        %v581 = vmax.f32 %v555, 0.0
        %v582 = vmax.f32 %v560, 0.0
        %v583 = vmax.f32 %v565, 0.0
        %v584 = vmax.f32 %v570, 0.0
        %v585 = vmax.f32 %v575, 0.0
        %586 = vmatprep.subr.mxu0 0.0
        %587 = vmatpush1.msra.mxu0 %v325
        %588 = vmatprep.subr.mxu0 0.0
        %589 = vmatpush1.msra.mxu0 %v326
        %590 = vmatprep.subr.mxu0 0.0
        %591 = vmatpush1.msra.mxu0 0.0
        %592 = vmatprep.subr.mxu0 0.0
        %593 = vmatpush1.msra.mxu0 0.0
        %594 = vmatprep.subr.mxu0 0.0
        %595 = vmatpush1.msra.mxu0 0.0
        %596 = vmatprep.subr.mxu0 0.0
        %597 = vmatpush1.msra.mxu0 0.0
        %598 = vmatprep.subr.mxu0 0.0
        %599 = vmatpush1.msra.mxu0 0.0
        %600 = vmatprep.subr.mxu0 0.0
        %601 = vmatpush1.msra.mxu0 0.0
        %602 = vmatprep.subr.mxu0 0.0
        %603 = vmatpush1.msra.mxu0 0.0
        %604 = vmatprep.subr.mxu0 0.0
        %605 = vmatpush1.msra.mxu0 0.0
        %606 = vmatprep.subr.mxu0 0.0
        %607 = vmatpush1.msra.mxu0 0.0
        %608 = vmatprep.subr.mxu0 0.0
        %609 = vmatpush1.msra.mxu0 0.0
        %610 = vmatprep.subr.mxu0 0.0
        %611 = vmatpush1.msra.mxu0 0.0
        %612 = vmatprep.subr.mxu0 0.0
        %613 = vmatpush1.msra.mxu0 0.0
        %614 = vmatprep.subr.mxu0 0.0
        %615 = vmatpush1.msra.mxu0 0.0
        %616 = vmatprep.subr.mxu0 0.0
        %617 = vmatpush1.msra.mxu0 0.0
        %618 = vmatprep.subr.mxu0 0.0
        %619 = vmatpush1.msra.mxu0 0.0
        %620 = vmatprep.subr.mxu0 0.0
        %621 = vmatpush1.msra.mxu0 0.0
        %622 = vmatprep.subr.mxu0 0.0
        %623 = vmatpush1.msra.mxu0 0.0
        %624 = vmatprep.subr.mxu0 0.0
        %625 = vmatpush1.msra.mxu0 0.0
        %626 = vmatprep.subr.mxu0 0.0
        %627 = vmatpush1.msra.mxu0 0.0
        %628 = vmatprep.subr.mxu0 0.0
        %629 = vmatpush1.msra.mxu0 0.0
        %630 = vmatprep.subr.mxu0 0.0
        %631 = vmatpush1.msra.mxu0 0.0
        %632 = vmatprep.subr.mxu0 0.0
        %633 = vmatpush1.msra.mxu0 0.0
        %634 = vmatprep.subr.mxu0 0.0
        %635 = vmatpush1.msra.mxu0 0.0
        %636 = vmatprep.subr.mxu0 0.0
        %637 = vmatpush1.msra.mxu0 0.0
        %638 = vmatprep.subr.mxu0 0.0
        %639 = vmatpush1.msra.mxu0 0.0
        %640 = vmatprep.subr.mxu0 0.0
        %641 = vmatpush1.msra.mxu0 0.0
        %642 = vmatprep.subr.mxu0 0.0
        %643 = vmatpush1.msra.mxu0 0.0
        %644 = vmatprep.subr.mxu0 0.0
        %645 = vmatpush1.msra.mxu0 0.0
        %646 = vmatprep.subr.mxu0 0.0
        %647 = vmatpush1.msra.mxu0 0.0
        %648 = vmatprep.subr.mxu0 0.0
        %649 = vmatpush1.msra.mxu0 0.0
        %650 = vmatprep.mubr.f32.mxu0 0.0
        %651 = vmatmul.mubr.f32.gmra.mrb[0].mxu0 %v329
        %v652 = vpop.f32.mrb[0].mxu0
        %v653 = vadd.f32 0.0, %v652
        %v654 = vpop.f32.mrb[0].mxu0
        %655 = vmatprep.mubr.f32.mxu0 0.0
        %656 = vmatmul.mubr.f32.gmra.mrb[0].mxu0 %v332
        %v657 = vpop.f32.mrb[0].mxu0
        %v658 = vadd.f32 0.0, %v657
        %v659 = vpop.f32.mrb[0].mxu0
        %660 = vmatprep.mubr.f32.mxu0 0.0
        %661 = vmatmul.mubr.f32.gmra.mrb[0].mxu0 %v335
        %v662 = vpop.f32.mrb[0].mxu0
        %v663 = vadd.f32 0.0, %v662
        %v664 = vpop.f32.mrb[0].mxu0
        %665 = vmatprep.mubr.f32.mxu0 0.0
        %666 = vmatmul.mubr.f32.gmra.mrb[0].mxu0 %v338
        %v667 = vpop.f32.mrb[0].mxu0
        %v668 = vadd.f32 0.0, %v667
        %v669 = vpop.f32.mrb[0].mxu0
        %670 = vmatprep.mubr.f32.mxu0 0.0
        %671 = vmatmul.mubr.f32.gmra.mrb[0].mxu0 %v341
        %v672 = vpop.f32.mrb[0].mxu0
        %v673 = vadd.f32 0.0, %v672
        %v674 = vpop.f32.mrb[0].mxu0
        %675 = vmatprep.mubr.f32.mxu0 0.0
        %676 = vmatmul.mubr.f32.gmra.mrb[0].mxu0 %v344
        %v677 = vpop.f32.mrb[0].mxu0
        %v678 = vadd.f32 0.0, %v677
        %v679 = vpop.f32.mrb[0].mxu0
        %680 = vmatprep.mubr.f32.mxu0 0.0
        %681 = vmatmul.mubr.f32.gmra.mrb[0].mxu0 %v347
        %v682 = vpop.f32.mrb[0].mxu0
        %v683 = vadd.f32 0.0, %v682
        %v684 = vpop.f32.mrb[0].mxu0
        %685 = vmatprep.mubr.f32.mxu0 0.0
        %686 = vmatmul.mubr.f32.gmra.mrb[0].mxu0 %v350
        %v687 = vpop.f32.mrb[0].mxu0
        %v688 = vadd.f32 0.0, %v687
        %v689 = vpop.f32.mrb[0].mxu0
        %690 = vdwg.mxu0
        %691 = vmatprep.subr.mxu0 0.0
        %692 = vmatpush1.msra.mxu0 %v309
        %693 = vmatprep.subr.mxu0 0.0
        %694 = vmatpush1.msra.mxu0 %v310
        %695 = vmatprep.subr.mxu0 0.0
        %696 = vmatpush1.msra.mxu0 %v311
        %697 = vmatprep.subr.mxu0 0.0
        %698 = vmatpush1.msra.mxu0 %v312
        %699 = vmatprep.subr.mxu0 0.0
        %700 = vmatpush1.msra.mxu0 %v313
        %701 = vmatprep.subr.mxu0 0.0
        %702 = vmatpush1.msra.mxu0 %v314
        %703 = vmatprep.subr.mxu0 0.0
        %704 = vmatpush1.msra.mxu0 %v315
        %705 = vmatprep.subr.mxu0 0.0
        %706 = vmatpush1.msra.mxu0 %v316
        %707 = vmatprep.subr.mxu0 0.0
        %708 = vmatpush1.msra.mxu0 %v317
        %709 = vmatprep.subr.mxu0 0.0
        %710 = vmatpush1.msra.mxu0 %v318
        %711 = vmatprep.subr.mxu0 0.0
        %712 = vmatpush1.msra.mxu0 %v319
        %713 = vmatprep.subr.mxu0 0.0
        %714 = vmatpush1.msra.mxu0 %v320
        %715 = vmatprep.subr.mxu0 0.0
        %716 = vmatpush1.msra.mxu0 %v321
        %717 = vmatprep.subr.mxu0 0.0
        %718 = vmatpush1.msra.mxu0 %v322
        %719 = vmatprep.subr.mxu0 0.0
        %720 = vmatpush1.msra.mxu0 %v323
        %721 = vmatprep.subr.mxu0 0.0
        %722 = vmatpush1.msra.mxu0 %v324
        %723 = vmatprep.subr.mxu0 0.0
        %724 = vmatpush1.msra.mxu0 0.0
        %725 = vmatprep.subr.mxu0 0.0
        %726 = vmatpush1.msra.mxu0 0.0
        %727 = vmatprep.subr.mxu0 0.0
        %728 = vmatpush1.msra.mxu0 0.0
        %729 = vmatprep.subr.mxu0 0.0
        %730 = vmatpush1.msra.mxu0 0.0
        %731 = vmatprep.subr.mxu0 0.0
        %732 = vmatpush1.msra.mxu0 0.0
        %733 = vmatprep.subr.mxu0 0.0
        %734 = vmatpush1.msra.mxu0 0.0
        %735 = vmatprep.subr.mxu0 0.0
        %736 = vmatpush1.msra.mxu0 0.0
        %737 = vmatprep.subr.mxu0 0.0
        %738 = vmatpush1.msra.mxu0 0.0
        %739 = vmatprep.subr.mxu0 0.0
        %740 = vmatpush1.msra.mxu0 0.0
        %741 = vmatprep.subr.mxu0 0.0
        %742 = vmatpush1.msra.mxu0 0.0
        %743 = vmatprep.subr.mxu0 0.0
        %744 = vmatpush1.msra.mxu0 0.0
        %745 = vmatprep.subr.mxu0 0.0
        %746 = vmatpush1.msra.mxu0 0.0
        %747 = vmatprep.subr.mxu0 0.0
        %748 = vmatpush1.msra.mxu0 0.0
        %749 = vmatprep.subr.mxu0 0.0
        %750 = vmatpush1.msra.mxu0 0.0
        %751 = vmatprep.subr.mxu0 0.0
        %752 = vmatpush1.msra.mxu0 0.0
        %753 = vmatprep.subr.mxu0 0.0
        %754 = vmatpush1.msra.mxu0 0.0
        %755 = vmatprep.mubr.f32.mxu0 0.0
        %756 = vmatmul.mubr.f32.gmra.mrb[0].mxu0 %v578
        %v757 = vpop.f32.mrb[0].mxu0
        %v758 = vadd.f32 %v653, %v757
        %v759 = vpop.f32.mrb[0].mxu0
        %760 = vmatprep.mubr.f32.mxu0 0.0
        %761 = vmatmul.mubr.f32.gmra.mrb[0].mxu0 %v579
        %v762 = vpop.f32.mrb[0].mxu0
        %v763 = vadd.f32 %v658, %v762
        %v764 = vpop.f32.mrb[0].mxu0
        %765 = vmatprep.mubr.f32.mxu0 0.0
        %766 = vmatmul.mubr.f32.gmra.mrb[0].mxu0 %v580
        %v767 = vpop.f32.mrb[0].mxu0
        %v768 = vadd.f32 %v663, %v767
        %v769 = vpop.f32.mrb[0].mxu0
        %770 = vmatprep.mubr.f32.mxu0 0.0
        %771 = vmatmul.mubr.f32.gmra.mrb[0].mxu0 %v581
        %v772 = vpop.f32.mrb[0].mxu0
        %v773 = vadd.f32 %v668, %v772
        %v774 = vpop.f32.mrb[0].mxu0
        %775 = vmatprep.mubr.f32.mxu0 0.0
        %776 = vmatmul.mubr.f32.gmra.mrb[0].mxu0 %v582
        %v777 = vpop.f32.mrb[0].mxu0
        %v778 = vadd.f32 %v673, %v777
        %v779 = vpop.f32.mrb[0].mxu0
        %780 = vmatprep.mubr.f32.mxu0 0.0
        %781 = vmatmul.mubr.f32.gmra.mrb[0].mxu0 %v583
        %v782 = vpop.f32.mrb[0].mxu0
        %v783 = vadd.f32 %v678, %v782
        %v784 = vpop.f32.mrb[0].mxu0
        %785 = vmatprep.mubr.f32.mxu0 0.0
        %786 = vmatmul.mubr.f32.gmra.mrb[0].mxu0 %v584
        %v787 = vpop.f32.mrb[0].mxu0
        %v788 = vadd.f32 %v683, %v787
        %v789 = vpop.f32.mrb[0].mxu0
        %790 = vmatprep.mubr.f32.mxu0 0.0
        %791 = vmatmul.mubr.f32.gmra.mrb[0].mxu0 %v585
        %v792 = vpop.f32.mrb[0].mxu0
        %v793 = vadd.f32 %v688, %v792
        %v794 = vpop.f32.mrb[0].mxu0
        %795 = vdwg.mxu0
        %v796 = vmax.f32 %v758, 0.0
        %v797 = vmax.f32 %v763, 0.0
        %v798 = vmax.f32 %v768, 0.0
        %v799 = vmax.f32 %v773, 0.0
        %v800 = vmax.f32 %v778, 0.0
        %v801 = vmax.f32 %v783, 0.0
        %v802 = vmax.f32 %v788, 0.0
        %v803 = vmax.f32 %v793, 0.0
        %804 = vst [vmem:[%s275] sm:$0xff] %v796
        %805 = vst [vmem:[%s275 + $0x8] sm:$0xff] %v797
        %806 = vst [vmem:[%s275 + $0x10] sm:$0xff] %v798
        %807 = vst [vmem:[%s275 + $0x18] sm:$0xff] %v799
        %808 = vst [vmem:[%s275 + $0x20] sm:$0xff] %v800
        %809 = vst [vmem:[%s275 + $0x28] sm:$0xff] %v801
        %810 = vst [vmem:[%s275 + $0x30] sm:$0xff] %v802
        %811 = vst [vmem:[%s275 + $0x38] sm:$0xff] %v803
        %s812 = sand.u32 %s161, 1
        %s813 = scalar_lea.sflag [#allocation4], %s812
        %s814 = sand.u32 %s161, 1
        %s815 = smul.addr %s814, 64
        %s816 = scalar_lea.vmem [#allocation7], %s815
        // Predicated region
        $region53: #{tpu_custom_call.1} parent=43 // pred_check
          %p817 = pneg %p171
        $region54: #{tpu_custom_call.1} parent=43 // pred_check_branch
          %819 = sbr.rel (%p817) target = $region56
        $region55: #{tpu_custom_call.1} parent=43 // pred_region
          %s820 = smul.u32 8, %s22
          %s822 = ssub.s32 1024, 1024
          %823 = vsyncadd %s813, %s822
          %s824 = smul.addr %s820, 128
          %s825 = scalar_lea.hbm %s6, %s824
          %s826 = sshll.u32 %s816, 4
          %s827 = int_to_ptr.vmem [resolvable:$true] %s826
          %832 = dma.vmem_to_hbm [thread:$0]  %s827, 1024, %s825, %s813, 128, 128, 8
        $region56: #{tpu_custom_call.1} parent=43 // pred_fallthru
          _
      $region44: #{tpu_custom_call.1} parent=5 // pred_fallthru
        _
      %p833 = scmp.le.s32.totalorder 2, %s17
      // Predicated region
      $region57: #{tpu_custom_call.1} parent=5 // pred_check
        %p834 = pneg %p833
      $region58: #{tpu_custom_call.1} parent=5 // pred_check_branch
        %836 = sbr.rel (%p834) target = $region60
      $region59: #{tpu_custom_call.1} parent=5 // pred_region
        %s837 = ssub.s32 %s17, 2
        // Predicated region
        $region61: #{tpu_custom_call.1} parent=59 // pred_check
          %p838 = pneg %p177
        $region62: #{tpu_custom_call.1} parent=59 // pred_check_branch
          %840 = sbr.rel (%p838) target = $region64
        $region63: #{tpu_custom_call.1} parent=59 // pred_region
          %s841 = sand.u32 %s162, 1
          %s842 = scalar_lea.sflag [#allocation4], %s841
          %s843 = sand.u32 %s162, 1
          %s844 = smul.addr %s843, 64
          %s845 = scalar_lea.vmem [#allocation7], %s844
          %846 = dma.done %s842, 1024
        $region64: #{tpu_custom_call.1} parent=59 // pred_fallthru
          _
      $region60: #{tpu_custom_call.1} parent=5 // pred_fallthru
        _
    $region6: #{tpu_custom_call.1} parent=1 // loop_footer
      %s21 = sadd.s32 1, %s17
    $region7: #{tpu_custom_call.1} parent=1 // loop_footer_branch
      %16 = sbr.rel target = $region3
    $region8: #{tpu_custom_call.1} parent=1 // loop_exit
      _
    %847 = vsyncpa [#allocation3], 1
    %s848 = scalar_lea.sflag [#allocation3], 1
    %849 = vsyncpa %s848, 1
    %850 = vsyncpa [#allocation6], 1
    %851 = vsyncpa [#allocation4], 1
    %s852 = scalar_lea.sflag [#allocation4], 1
    %853 = vsyncpa %s852, 1

</llo_original>
